<compile_context>
chip_gen: v7x
topology: tpu7x:2x2x1
jax: 0.10.0
libtpu: 0.0.40
codegen_flags: <defaults>
</compile_context>

<pallas_src>
import jax
import jax.numpy as jnp
from jax.experimental import pallas as pl
from jax.experimental.pallas import tpu as pltpu


def _round_up(n: int, m: int) -> int:
    return ((n + m - 1) // m) * m


def attribute_network_kernel(x_ref, w1_ref, b1_ref, w2_ref, b2_ref, out_ref):
    # In-kernel bf16 cast of the activation (VPU cast, hides under the DMA).
    x = x_ref[...].astype(jnp.bfloat16)
    # fc1: bf16 operands, f32 MXU accumulation; bias + ReLU in f32.
    h = jnp.dot(x, w1_ref[...], preferred_element_type=jnp.float32)
    h = jnp.maximum(h + b1_ref[...], 0.0)            # b1 is [1, hid] -> broadcasts
    # fc2: hidden activation back to bf16 for the MXU, accumulate in f32.
    o = jnp.dot(h.astype(jnp.bfloat16), w2_ref[...],
                preferred_element_type=jnp.float32)
    o = o + b2_ref[...]                               # b2 is [1, out]
    out_ref[...] = jax.nn.sigmoid(o).astype(out_ref.dtype)


def prepare_params(w1, b1, w2, b2):
    """One-time parameter prep (hoisted out of the per-call path).

    Weights are stored transposed vs. PyTorch nn.Linear (x @ w layout) and cast
    to bf16 for the MXU; biases stay f32 with a leading broadcast axis.
    """
    return (w1.astype(jnp.bfloat16),
            b1.astype(jnp.float32).reshape(1, -1),
            w2.astype(jnp.bfloat16),
            b2.astype(jnp.float32).reshape(1, -1))


def attribute_network(x, params, *, block_batch=1024, vmem_budget_bytes=24 << 20):
    """x: [B, in]; params from prepare_params(w1, b1, w2, b2)."""
    w1, b1, w2, b2 = params
    B, in_dim = x.shape
    hid = w1.shape[1]
    out = w2.shape[1]
    assert w1.shape[0] == in_dim and b1.shape == (1, hid)
    assert w2.shape[0] == hid and b2.shape == (1, out)

    out_dtype = x.dtype
    x_bytes = jnp.dtype(x.dtype).itemsize
    o_bytes = jnp.dtype(out_dtype).itemsize

    # Batch tile: multiple of 8 sublanes, split in two so grid_b >= 2 whenever
    # B > 8 rows (keeps v7x's second TensorCore busy), capped at block_batch.
    tb = min(block_batch, max(8, _round_up(pl.cdiv(B, 2), 8)))

    # VMEM footprint: resident bf16 weights + f32 biases (single-buffered) plus
    # double-buffered x and output tiles.  Shrink tb if it would blow the budget.
    resident = 2 * (in_dim * hid + hid * out) + 4 * (hid + out)

    def footprint(t):
        return resident + 2 * t * in_dim * x_bytes + 2 * t * out * o_bytes

    while tb > 8 and footprint(tb) > vmem_budget_bytes:
        tb = max(8, _round_up(tb // 2, 8))

    grid_b = pl.cdiv(B, tb)   # ragged last tile: Pallas masks the OOB writes
    vmem_limit = int(min(max(2 * footprint(tb) + (1 << 20), 16 << 20), 64 << 20))

    def run(single_buffer_resident):
        def resident_spec(shape):
            index_map = lambda i, _nd=len(shape): (0,) * _nd
            if single_buffer_resident:
                try:
                    return pl.BlockSpec(shape, index_map, memory_space=pltpu.VMEM,
                                        pipeline_mode=pl.Buffered(1))
                except TypeError:
                    pass
            return pl.BlockSpec(shape, index_map, memory_space=pltpu.VMEM)

        return pl.pallas_call(
            attribute_network_kernel,
            out_shape=jax.ShapeDtypeStruct((B, out), out_dtype),
            grid_spec=pl.GridSpec(
                grid=(grid_b,),
                in_specs=[
                    # Batch-tiled activation: new tile each grid step.
                    pl.BlockSpec((tb, in_dim), lambda i: (i, 0),
                                 memory_space=pltpu.VMEM),
                    # Weights / biases: constant index_map -> VMEM-resident.
                    resident_spec((in_dim, hid)),
                    resident_spec((1, hid)),
                    resident_spec((hid, out)),
                    resident_spec((1, out)),
                ],
                out_specs=pl.BlockSpec((tb, out), lambda i: (i, 0),
                                       memory_space=pltpu.VMEM),
            ),
            compiler_params=pltpu.CompilerParams(
                dimension_semantics=("parallel",),   # batch tiles are independent
                vmem_limit_bytes=vmem_limit,
            ),
        )(x, w1, b1, w2, b2)

    try:
        return run(True)
    except Exception:
        # Fall back to default double-buffered resident blocks if Buffered(1)
        # is rejected by this JAX / Mosaic version.
        return run(False)


if __name__ == "__main__":
    # Small shapes consistent with the module's forward.
    batch, input_size, hidden_size, output_size = 8, 32, 64, 16

    key = jax.random.PRNGKey(0)
    kx, kw1, kb1, kw2, kb2 = jax.random.split(key, 5)

    x = jax.random.normal(kx, (batch, input_size), dtype=jnp.float32)
    # Deterministic param init (PyTorch-Linear-like uniform bounds).
    bound1 = 1.0 / (input_size ** 0.5)
    bound2 = 1.0 / (hidden_size ** 0.5)
    w1 = jax.random.uniform(kw1, (input_size, hidden_size), jnp.float32, -bound1, bound1)
    b1 = jax.random.uniform(kb1, (hidden_size,), jnp.float32, -bound1, bound1)
    w2 = jax.random.uniform(kw2, (hidden_size, output_size), jnp.float32, -bound2, bound2)
    b2 = jax.random.uniform(kb2, (output_size,), jnp.float32, -bound2, bound2)

    params = prepare_params(w1, b1, w2, b2)   # one-time prep; cache in production
    y = attribute_network(x, params)
    y = jax.block_until_ready(y)

    # Pure-JAX f32 reference; tolerance loosened because matmul operands are bf16.
    ref = jax.nn.sigmoid(jnp.maximum(x @ w1 + b1, 0.0) @ w2 + b2)
    assert y.shape == (batch, output_size)
    assert jnp.allclose(y, ref, atol=2e-2, rtol=2e-2)

    print("KERNEL_OK")
</pallas_src>

<mosaic_0001>
module attributes {stable_mosaic.version = 11 : i64} {
  func.func @attribute_network_kernel(%arg0: i32, %arg1: memref<8x32xf32, #tpu.memory_space<vmem>>, %arg2: memref<32x64xbf16, #tpu.memory_space<vmem>>, %arg3: memref<1x64xf32, #tpu.memory_space<vmem>>, %arg4: memref<64x16xbf16, #tpu.memory_space<vmem>>, %arg5: memref<1x16xf32, #tpu.memory_space<vmem>>, %arg6: memref<8x16xf32, #tpu.memory_space<vmem>>) attributes {dimension_semantics = [#tpu.dimension_semantics<parallel>], iteration_bounds = array<i64: 1>, scalar_prefetch = 0 : i64, scratch_operands = 0 : i64, tpu.core_type = #tpu.core_type<tc>, window_params = [{transform_indices = @transform_0, window_bounds = array<i64: 8, 32>}, {pipeline_mode = #tpu.pipeline_mode<synchronous>, transform_indices = @transform_1, window_bounds = array<i64: 32, 64>}, {pipeline_mode = #tpu.pipeline_mode<synchronous>, transform_indices = @transform_2, window_bounds = array<i64: 1, 64>}, {pipeline_mode = #tpu.pipeline_mode<synchronous>, transform_indices = @transform_3, window_bounds = array<i64: 64, 16>}, {pipeline_mode = #tpu.pipeline_mode<synchronous>, transform_indices = @transform_4, window_bounds = array<i64: 1, 16>}, {transform_indices = @transform_5, window_bounds = array<i64: 8, 16>}]} {
    %c0 = arith.constant 0 : index
    %c0_0 = arith.constant 0 : index
    %0 = vector.load %arg1[%c0, %c0_0] : memref<8x32xf32, #tpu.memory_space<vmem>>, vector<8x32xf32>
    %1 = arith.truncf %0 : vector<8x32xf32> to vector<8x32xbf16>
    %c0_1 = arith.constant 0 : index
    %c0_2 = arith.constant 0 : index
    %2 = vector.load %arg2[%c0_1, %c0_2] : memref<32x64xbf16, #tpu.memory_space<vmem>>, vector<32x64xbf16>
    %cst = arith.constant dense<0.000000e+00> : vector<8x64xf32>
    %3 = tpu.matmul %1, %2, %cst {dimension_numbers = #tpu.dot_dimension_numbers<[1], [0], [0], [1], [0, 0, 1, 1], [], []>} : vector<8x32xbf16>, vector<32x64xbf16>, vector<8x64xf32> -> vector<8x64xf32>
    %c0_3 = arith.constant 0 : index
    %c0_4 = arith.constant 0 : index
    %4 = vector.load %arg3[%c0_3, %c0_4] : memref<1x64xf32, #tpu.memory_space<vmem>>, vector<1x64xf32>
    %5 = vector.broadcast %4 : vector<1x64xf32> to vector<8x64xf32>
    %6 = arith.addf %3, %5 : vector<8x64xf32>
    %cst_5 = arith.constant 0.000000e+00 : f32
    %7 = vector.broadcast %cst_5 : f32 to vector<8x64xf32>
    %8 = arith.maximumf %6, %7 : vector<8x64xf32>
    %9 = arith.truncf %8 : vector<8x64xf32> to vector<8x64xbf16>
    %c0_6 = arith.constant 0 : index
    %c0_7 = arith.constant 0 : index
    %10 = vector.load %arg4[%c0_6, %c0_7] : memref<64x16xbf16, #tpu.memory_space<vmem>>, vector<64x16xbf16>
    %cst_8 = arith.constant dense<0.000000e+00> : vector<8x16xf32>
    %11 = tpu.matmul %9, %10, %cst_8 {dimension_numbers = #tpu.dot_dimension_numbers<[1], [0], [0], [1], [0, 0, 1, 1], [], []>} : vector<8x64xbf16>, vector<64x16xbf16>, vector<8x16xf32> -> vector<8x16xf32>
    %c0_9 = arith.constant 0 : index
    %c0_10 = arith.constant 0 : index
    %12 = vector.load %arg5[%c0_9, %c0_10] : memref<1x16xf32, #tpu.memory_space<vmem>>, vector<1x16xf32>
    %13 = vector.broadcast %12 : vector<1x16xf32> to vector<8x16xf32>
    %14 = arith.addf %11, %13 : vector<8x16xf32>
    %15 = arith.negf %14 : vector<8x16xf32>
    %16 = math.exp %15 : vector<8x16xf32>
    %cst_11 = arith.constant 1.000000e+00 : f32
    %17 = vector.broadcast %cst_11 : f32 to vector<8x16xf32>
    %18 = arith.addf %17, %16 : vector<8x16xf32>
    %19 = arith.divf %17, %18 : vector<8x16xf32>
    %c0_12 = arith.constant 0 : index
    %c0_13 = arith.constant 0 : index
    %20 = vector.load %arg6[%c0_12, %c0_13] : memref<8x16xf32, #tpu.memory_space<vmem>>, vector<8x16xf32>
    tpu.vector_store %arg6[%c0_12, %c0_13], %19 {strides = array<i32>} : memref<8x16xf32, #tpu.memory_space<vmem>>, vector<8x16xf32>,
    return
  }
  func.func @transform_0(%arg0: i32) -> (i32, i32) {
    %c0_i32 = arith.constant 0 : i32
    %c0_i32_0 = arith.constant 0 : i32
    return %arg0, %c0_i32 : i32, i32
  }
  func.func @transform_1(%arg0: i32) -> (i32, i32) {
    %c0_i32 = arith.constant 0 : i32
    %c0_i32_0 = arith.constant 0 : i32
    %c0_i32_1 = arith.constant 0 : i32
    return %c0_i32, %c0_i32_0 : i32, i32
  }
  func.func @transform_2(%arg0: i32) -> (i32, i32) {
    %c0_i32 = arith.constant 0 : i32
    %c0_i32_0 = arith.constant 0 : i32
    %c0_i32_1 = arith.constant 0 : i32
    return %c0_i32, %c0_i32_0 : i32, i32
  }
  func.func @transform_3(%arg0: i32) -> (i32, i32) {
    %c0_i32 = arith.constant 0 : i32
    %c0_i32_0 = arith.constant 0 : i32
    %c0_i32_1 = arith.constant 0 : i32
    return %c0_i32, %c0_i32_0 : i32, i32
  }
  func.func @transform_4(%arg0: i32) -> (i32, i32) {
    %c0_i32 = arith.constant 0 : i32
    %c0_i32_0 = arith.constant 0 : i32
    %c0_i32_1 = arith.constant 0 : i32
    return %c0_i32, %c0_i32_0 : i32, i32
  }
  func.func @transform_5(%arg0: i32) -> (i32, i32) {
    %c0_i32 = arith.constant 0 : i32
    %c0_i32_0 = arith.constant 0 : i32
    return %arg0, %c0_i32 : i32, i32
  }
}

module attributes {stable_mosaic.version = 11 : i64} {
  func.func @attribute_network_kernel(%arg0: i32, %arg1: memref<8x32xf32, #tpu.memory_space<vmem>>, %arg2: memref<32x64xbf16, #tpu.memory_space<vmem>>, %arg3: memref<1x64xf32, #tpu.memory_space<vmem>>, %arg4: memref<64x16xbf16, #tpu.memory_space<vmem>>, %arg5: memref<1x16xf32, #tpu.memory_space<vmem>>, %arg6: memref<8x16xf32, #tpu.memory_space<vmem>>) attributes {dimension_semantics = [#tpu.dimension_semantics<parallel>], iteration_bounds = array<i64: 1>, scalar_prefetch = 0 : i64, scratch_operands = 0 : i64, tpu.core_type = #tpu.core_type<tc>, window_params = [{transform_indices = @transform_0, window_bounds = array<i64: 8, 32>}, {pipeline_mode = #tpu.pipeline_mode<synchronous>, transform_indices = @transform_1, window_bounds = array<i64: 32, 64>}, {pipeline_mode = #tpu.pipeline_mode<synchronous>, transform_indices = @transform_2, window_bounds = array<i64: 1, 64>}, {pipeline_mode = #tpu.pipeline_mode<synchronous>, transform_indices = @transform_3, window_bounds = array<i64: 64, 16>}, {pipeline_mode = #tpu.pipeline_mode<synchronous>, transform_indices = @transform_4, window_bounds = array<i64: 1, 16>}, {transform_indices = @transform_5, window_bounds = array<i64: 8, 16>}]} {
    %c0 = arith.constant 0 : index
    %c0_0 = arith.constant 0 : index
    %0 = vector.load %arg1[%c0, %c0_0] : memref<8x32xf32, #tpu.memory_space<vmem>>, vector<8x32xf32>
    %1 = arith.truncf %0 : vector<8x32xf32> to vector<8x32xbf16>
    %c0_1 = arith.constant 0 : index
    %c0_2 = arith.constant 0 : index
    %2 = vector.load %arg2[%c0_1, %c0_2] : memref<32x64xbf16, #tpu.memory_space<vmem>>, vector<32x64xbf16>
    %cst = arith.constant dense<0.000000e+00> : vector<8x64xf32>
    %3 = tpu.matmul %1, %2, %cst {dimension_numbers = #tpu.dot_dimension_numbers<[1], [0], [0], [1], [0, 0, 1, 1], [], []>} : vector<8x32xbf16>, vector<32x64xbf16>, vector<8x64xf32> -> vector<8x64xf32>
    %c0_3 = arith.constant 0 : index
    %c0_4 = arith.constant 0 : index
    %4 = vector.load %arg3[%c0_3, %c0_4] : memref<1x64xf32, #tpu.memory_space<vmem>>, vector<1x64xf32>
    %5 = vector.broadcast %4 : vector<1x64xf32> to vector<8x64xf32>
    %6 = arith.addf %3, %5 : vector<8x64xf32>
    %cst_5 = arith.constant 0.000000e+00 : f32
    %7 = vector.broadcast %cst_5 : f32 to vector<8x64xf32>
    %8 = arith.maximumf %6, %7 : vector<8x64xf32>
    %9 = arith.truncf %8 : vector<8x64xf32> to vector<8x64xbf16>
    %c0_6 = arith.constant 0 : index
    %c0_7 = arith.constant 0 : index
    %10 = vector.load %arg4[%c0_6, %c0_7] : memref<64x16xbf16, #tpu.memory_space<vmem>>, vector<64x16xbf16>
    %cst_8 = arith.constant dense<0.000000e+00> : vector<8x16xf32>
    %11 = tpu.matmul %9, %10, %cst_8 {dimension_numbers = #tpu.dot_dimension_numbers<[1], [0], [0], [1], [0, 0, 1, 1], [], []>} : vector<8x64xbf16>, vector<64x16xbf16>, vector<8x16xf32> -> vector<8x16xf32>
    %c0_9 = arith.constant 0 : index
    %c0_10 = arith.constant 0 : index
    %12 = vector.load %arg5[%c0_9, %c0_10] : memref<1x16xf32, #tpu.memory_space<vmem>>, vector<1x16xf32>
    %13 = vector.broadcast %12 : vector<1x16xf32> to vector<8x16xf32>
    %14 = arith.addf %11, %13 : vector<8x16xf32>
    %15 = arith.negf %14 : vector<8x16xf32>
    %16 = math.exp %15 : vector<8x16xf32>
    %cst_11 = arith.constant 1.000000e+00 : f32
    %17 = vector.broadcast %cst_11 : f32 to vector<8x16xf32>
    %18 = arith.addf %17, %16 : vector<8x16xf32>
    %19 = arith.divf %17, %18 : vector<8x16xf32>
    %c0_12 = arith.constant 0 : index
    %c0_13 = arith.constant 0 : index
    %20 = vector.load %arg6[%c0_12, %c0_13] : memref<8x16xf32, #tpu.memory_space<vmem>>, vector<8x16xf32>
    tpu.vector_store %arg6[%c0_12, %c0_13], %19 {strides = array<i32>} : memref<8x16xf32, #tpu.memory_space<vmem>>, vector<8x16xf32>,
    return
  }
  func.func @transform_0(%arg0: i32) -> (i32, i32) {
    %c0_i32 = arith.constant 0 : i32
    %c0_i32_0 = arith.constant 0 : i32
    return %arg0, %c0_i32 : i32, i32
  }
  func.func @transform_1(%arg0: i32) -> (i32, i32) {
    %c0_i32 = arith.constant 0 : i32
    %c0_i32_0 = arith.constant 0 : i32
    %c0_i32_1 = arith.constant 0 : i32
    return %c0_i32, %c0_i32_0 : i32, i32
  }
  func.func @transform_2(%arg0: i32) -> (i32, i32) {
    %c0_i32 = arith.constant 0 : i32
    %c0_i32_0 = arith.constant 0 : i32
    %c0_i32_1 = arith.constant 0 : i32
    return %c0_i32, %c0_i32_0 : i32, i32
  }
  func.func @transform_3(%arg0: i32) -> (i32, i32) {
    %c0_i32 = arith.constant 0 : i32
    %c0_i32_0 = arith.constant 0 : i32
    %c0_i32_1 = arith.constant 0 : i32
    return %c0_i32, %c0_i32_0 : i32, i32
  }
  func.func @transform_4(%arg0: i32) -> (i32, i32) {
    %c0_i32 = arith.constant 0 : i32
    %c0_i32_0 = arith.constant 0 : i32
    %c0_i32_1 = arith.constant 0 : i32
    return %c0_i32, %c0_i32_0 : i32, i32
  }
  func.func @transform_5(%arg0: i32) -> (i32, i32) {
    %c0_i32 = arith.constant 0 : i32
    %c0_i32_0 = arith.constant 0 : i32
    return %arg0, %c0_i32 : i32, i32
  }
}

</mosaic_0001>

<llo_original>
// kernel: tpu_custom_call.1
$region0: #{tpu_custom_call.1}
  #allocation0 [shape = 'u32[]', space=smem, size = 0x4, offset = 0x4, fixed_abs, tag = 'smem constant byte address 0x4 - core index']
  #allocation1 [shape = 'u32[144,128]{1,0:T(1,128)}', space=vmem, size = 0x12000, scoped, tag = 'internal scratch']
  %s0 = inlined_call_operand.vmem [shape: f32[8,32], index: 0, kind: input, shape index: {}]
  %s1 = inlined_call_operand.vmem [shape: bf16[32,64], index: 1, kind: input, shape index: {}]
  %s2 = inlined_call_operand.vmem [shape: f32[1,64], index: 2, kind: input, shape index: {}]
  %s3 = inlined_call_operand.vmem [shape: bf16[64,16], index: 3, kind: input, shape index: {}]
  %s4 = inlined_call_operand.vmem [shape: f32[1,16], index: 4, kind: input, shape index: {}]
  %s5 = inlined_call_operand.hbm [shape: f32[8,16], index: 5, kind: output, shape index: {}]
  %s6 = sld [smem:[#allocation0]]
  $region30: #{tpu_custom_call.1} parent=0
    _
  %s8 = ssub.s32 1, %s6
  %s9 = scalar_select 0, %s8, %s6
  $region1: #{tpu_custom_call.1} parent=0
    #allocation2 [shape = 'u8[4096]{0}', space=vmem, size = 0x1000, scoped, tag = 'output window, operand 0, single buffered']
    #allocation3 [shape = 's32[1]{0}', space=sflag, size = 0x4, scoped, tag = 'scoped memory for tpu_custom_call.1']
    %10 = vsyncpa [#allocation3], 0
    // Predicated region
    $region2: #{tpu_custom_call.1} parent=1 // pred_check
      _
    $region3: #{tpu_custom_call.1} parent=1 // pred_check_branch
      %12 = sbr.rel (0) target = $region5
    $region4: #{tpu_custom_call.1} parent=1 // pred_region
      _
    $region5: #{tpu_custom_call.1} parent=1 // pred_fallthru
      _
    // Predicated region
    $region6: #{tpu_custom_call.1} parent=1 // pred_check
      _
    $region7: #{tpu_custom_call.1} parent=1 // pred_check_branch
      %14 = sbr.rel (0) target = $region9
    $region8: #{tpu_custom_call.1} parent=1 // pred_region
      _
    $region9: #{tpu_custom_call.1} parent=1 // pred_fallthru
      _
    // Predicated region
    $region10: #{tpu_custom_call.1} parent=1 // pred_check
      _
    $region11: #{tpu_custom_call.1} parent=1 // pred_check_branch
      %16 = sbr.rel (0) target = $region13
    $region12: #{tpu_custom_call.1} parent=1 // pred_region
      _
    $region13: #{tpu_custom_call.1} parent=1 // pred_fallthru
      _
    // Predicated region
    $region14: #{tpu_custom_call.1} parent=1 // pred_check
      _
    $region15: #{tpu_custom_call.1} parent=1 // pred_check_branch
      %18 = sbr.rel (0) target = $region17
    $region16: #{tpu_custom_call.1} parent=1 // pred_region
      _
    $region17: #{tpu_custom_call.1} parent=1 // pred_fallthru
      _
    // Predicated region
    $region18: #{tpu_custom_call.1} parent=1 // pred_check
      _
    $region19: #{tpu_custom_call.1} parent=1 // pred_check_branch
      %20 = sbr.rel (0) target = $region21
    $region20: #{tpu_custom_call.1} parent=1 // pred_region
      _
    $region21: #{tpu_custom_call.1} parent=1 // pred_fallthru
      _
    %v22 = vld [vmem:[%s0] sm:$0xff]
    %v23 = vpack.c.bf16 %v22, %v22
    %v24 = vld [vmem:[%s1] sm:$0xf]
    %v25 = vld [vmem:[%s1 + $0x4] sm:$0xf]
    %v26 = vld [vmem:[%s1 + $0x8] sm:$0xf]
    %v27 = vld [vmem:[%s1 + $0xc] sm:$0xf]
    %v28 = vld [vmem:[%s2] sm:$0x1]
    %v30 = vlaneseq
    %v31 = vshrl.u32 %v30, 7
    %v32 = vsub.s32 0, %v31
    %v33 = vrot.slane %v28, %v32
    %v39 = vunpack.c.l.b16 %v24
    %v40 = vunpack.c.l.b16 %v25
    %v41 = vunpack.c.l.b16 %v26
    %v42 = vunpack.c.l.b16 %v27
    %v43 = vpack.c.b16 %v40, %v39
    %v44 = vpack.c.b16 %v42, %v41
    %vm47 = vcmask 261120
    %v49 = vsel %vm47, %v23, 0
    %51 = vmatprep.subr.bf16.mxu0 0
    %52 = vmatpush1.bf16.msra.mxu0 %v43
    %53 = vmatprep.subr.bf16.mxu0 0
    %54 = vmatpush1.bf16.msra.mxu0 %v44
    %55 = vmatprep.subr.bf16.mxu0 0
    %56 = vmatpush1.bf16.msra.mxu0 0
    %57 = vmatprep.subr.bf16.mxu0 0
    %58 = vmatpush1.bf16.msra.mxu0 0
    %59 = vmatprep.subr.bf16.mxu0 0
    %60 = vmatpush1.bf16.msra.mxu0 0
    %61 = vmatprep.subr.bf16.mxu0 0
    %62 = vmatpush1.bf16.msra.mxu0 0
    %63 = vmatprep.subr.bf16.mxu0 0
    %64 = vmatpush1.bf16.msra.mxu0 0
    %65 = vmatprep.subr.bf16.mxu0 0
    %66 = vmatpush1.bf16.msra.mxu0 0
    %67 = vmatprep.subr.bf16.mxu0 0
    %68 = vmatpush1.bf16.msra.mxu0 0
    %69 = vmatprep.subr.bf16.mxu0 0
    %70 = vmatpush1.bf16.msra.mxu0 0
    %71 = vmatprep.subr.bf16.mxu0 0
    %72 = vmatpush1.bf16.msra.mxu0 0
    %73 = vmatprep.subr.bf16.mxu0 0
    %74 = vmatpush1.bf16.msra.mxu0 0
    %75 = vmatprep.subr.bf16.mxu0 0
    %76 = vmatpush1.bf16.msra.mxu0 0
    %77 = vmatprep.subr.bf16.mxu0 0
    %78 = vmatpush1.bf16.msra.mxu0 0
    %79 = vmatprep.subr.bf16.mxu0 0
    %80 = vmatpush1.bf16.msra.mxu0 0
    %81 = vmatprep.subr.bf16.mxu0 0
    %82 = vmatpush1.bf16.msra.mxu0 0
    %83 = vmatprep.mubr.bf16.mxu0 0
    %84 = vmatmul.mubr.bf16.gmra.mrb[0].mxu0 %v49
    %v85 = vpop.f32.mrb[0].mxu0
    %v86 = vadd.f32 %v33, %v85
    %v87 = vpop.f32.mrb[0].mxu0
    %v88 = vpop.f32.mrb[0].mxu0
    %v89 = vpop.f32.mrb[0].mxu0
    %90 = vdwg.mxu0
    %v91 = vmax.f32 %v86, 0.0
    %v92 = vpack.c.bf16 %v91, %v91
    %v93 = vld [vmem:[%s3] sm:$0xf]
    %v94 = vld [vmem:[%s3 + $0x4] sm:$0xf]
    %v95 = vld [vmem:[%s3 + $0x8] sm:$0xf]
    %v96 = vld [vmem:[%s3 + $0xc] sm:$0xf]
    %v97 = vld [vmem:[%s3 + $0x10] sm:$0xf]
    %v98 = vld [vmem:[%s3 + $0x14] sm:$0xf]
    %v99 = vld [vmem:[%s3 + $0x18] sm:$0xf]
    %v100 = vld [vmem:[%s3 + $0x1c] sm:$0xf]
    %v101 = vld [vmem:[%s4] sm:$0x1]
    %v103 = vlaneseq
    %v104 = vshrl.u32 %v103, 7
    %v105 = vsub.s32 0, %v104
    %v106 = vrot.slane %v101, %v105
    %v116 = vunpack.c.l.b16 %v93
    %v117 = vunpack.c.l.b16 %v94
    %v118 = vunpack.c.l.b16 %v95
    %v119 = vunpack.c.l.b16 %v96
    %v120 = vunpack.c.l.b16 %v97
    %v121 = vunpack.c.l.b16 %v98
    %v122 = vunpack.c.l.b16 %v99
    %v123 = vunpack.c.l.b16 %v100
    %v124 = vpack.c.b16 %v117, %v116
    %v125 = vpack.c.b16 %v119, %v118
    %v126 = vpack.c.b16 %v121, %v120
    %v127 = vpack.c.b16 %v123, %v122
    %vm132 = vcmask 523264
    %v134 = vsel %vm132, %v92, 0
    %136 = vmatprep.subr.bf16.mxu0 0
    %137 = vmatpush1.bf16.msra.mxu0 %v124
    %138 = vmatprep.subr.bf16.mxu0 0
    %139 = vmatpush1.bf16.msra.mxu0 %v125
    %140 = vmatprep.subr.bf16.mxu0 0
    %141 = vmatpush1.bf16.msra.mxu0 %v126
    %142 = vmatprep.subr.bf16.mxu0 0
    %143 = vmatpush1.bf16.msra.mxu0 %v127
    %144 = vmatprep.subr.bf16.mxu0 0
    %145 = vmatpush1.bf16.msra.mxu0 0
    %146 = vmatprep.subr.bf16.mxu0 0
    %147 = vmatpush1.bf16.msra.mxu0 0
    %148 = vmatprep.subr.bf16.mxu0 0
    %149 = vmatpush1.bf16.msra.mxu0 0
    %150 = vmatprep.subr.bf16.mxu0 0
    %151 = vmatpush1.bf16.msra.mxu0 0
    %152 = vmatprep.subr.bf16.mxu0 0
    %153 = vmatpush1.bf16.msra.mxu0 0
    %154 = vmatprep.subr.bf16.mxu0 0
    %155 = vmatpush1.bf16.msra.mxu0 0
    %156 = vmatprep.subr.bf16.mxu0 0
    %157 = vmatpush1.bf16.msra.mxu0 0
    %158 = vmatprep.subr.bf16.mxu0 0
    %159 = vmatpush1.bf16.msra.mxu0 0
    %160 = vmatprep.subr.bf16.mxu0 0
    %161 = vmatpush1.bf16.msra.mxu0 0
    %162 = vmatprep.subr.bf16.mxu0 0
    %163 = vmatpush1.bf16.msra.mxu0 0
    %164 = vmatprep.subr.bf16.mxu0 0
    %165 = vmatpush1.bf16.msra.mxu0 0
    %166 = vmatprep.subr.bf16.mxu0 0
    %167 = vmatpush1.bf16.msra.mxu0 0
    %168 = vmatprep.mubr.bf16.mxu0 0
    %169 = vmatmul.mubr.bf16.gmra.mrb[0].mxu0 %v134
    %v170 = vpop.f32.mrb[0].mxu0
    %v171 = vadd.f32 %v106, %v170
    %v172 = vpop.f32.mrb[0].mxu0
    %v173 = vpop.f32.mrb[0].mxu0
    %v174 = vpop.f32.mrb[0].mxu0
    %175 = vdwg.mxu0
    %v176 = vxor.u32 %v171, 2147483648
    %v177 = vmul.f32 %v176, 1.442695
    %v178 = vpow.pop %v177
    %v179 = vadd.f32 %v178, 1.0
    %v180 = vrcp.pop %v179
    %v181 = vmul.f32 1.0, %v180
    %vm182 = vcmask 130048
    %183 = vst.msk [vmem:[#allocation2] sm:$0xff] %vm182, %v181
    // Predicated region
    $region22: #{tpu_custom_call.1} parent=1 // pred_check
      _
    $region23: #{tpu_custom_call.1} parent=1 // pred_check_branch
      %185 = sbr.rel (0) target = $region25
    $region24: #{tpu_custom_call.1} parent=1 // pred_region
      %s187 = ssub.s32 128, 128
      %188 = vsyncadd [#allocation3], %s187
      %s190 = sshll.u32 [#allocation2], 4
      %s191 = int_to_ptr.vmem [resolvable:$true] %s190
      %193 = dma.vmem_to_hbm [thread:$0]  %s191, 128, %s5, [#allocation3]
    $region25: #{tpu_custom_call.1} parent=1 // pred_fallthru
      _
    // Predicated region
    $region26: #{tpu_custom_call.1} parent=1 // pred_check
      _
    $region27: #{tpu_custom_call.1} parent=1 // pred_check_branch
      %195 = sbr.rel (0) target = $region29
    $region28: #{tpu_custom_call.1} parent=1 // pred_region
      %196 = dma.done [#allocation3], 128
    $region29: #{tpu_custom_call.1} parent=1 // pred_fallthru
      _
    %197 = vsyncpa [#allocation3], 1

// kernel: tpu_custom_call.1
$region0: #{tpu_custom_call.1}
  #allocation0 [shape = 'u32[]', space=smem, size = 0x4, offset = 0x4, fixed_abs, tag = 'smem constant byte address 0x4 - core index']
  #allocation1 [shape = 'u32[144,128]{1,0:T(1,128)}', space=vmem, size = 0x12000, scoped, tag = 'internal scratch']
  %s0 = inlined_call_operand.vmem [shape: f32[8,32], index: 0, kind: input, shape index: {}]
  %s1 = inlined_call_operand.vmem [shape: bf16[32,64], index: 1, kind: input, shape index: {}]
  %s2 = inlined_call_operand.vmem [shape: f32[1,64], index: 2, kind: input, shape index: {}]
  %s3 = inlined_call_operand.vmem [shape: bf16[64,16], index: 3, kind: input, shape index: {}]
  %s4 = inlined_call_operand.vmem [shape: f32[1,16], index: 4, kind: input, shape index: {}]
  %s5 = inlined_call_operand.hbm [shape: f32[8,16], index: 5, kind: output, shape index: {}]
  %s6 = sld [smem:[#allocation0]]
  $region30: #{tpu_custom_call.1} parent=0
    _
  %s8 = ssub.s32 1, %s6
  %s9 = scalar_select 0, %s8, %s6
  $region1: #{tpu_custom_call.1} parent=0
    #allocation2 [shape = 'u8[4096]{0}', space=vmem, size = 0x1000, scoped, tag = 'output window, operand 0, single buffered']
    #allocation3 [shape = 's32[1]{0}', space=sflag, size = 0x4, scoped, tag = 'scoped memory for tpu_custom_call.1']
    %10 = vsyncpa [#allocation3], 0
    // Predicated region
    $region2: #{tpu_custom_call.1} parent=1 // pred_check
      _
    $region3: #{tpu_custom_call.1} parent=1 // pred_check_branch
      %12 = sbr.rel (0) target = $region5
    $region4: #{tpu_custom_call.1} parent=1 // pred_region
      _
    $region5: #{tpu_custom_call.1} parent=1 // pred_fallthru
      _
    // Predicated region
    $region6: #{tpu_custom_call.1} parent=1 // pred_check
      _
    $region7: #{tpu_custom_call.1} parent=1 // pred_check_branch
      %14 = sbr.rel (0) target = $region9
    $region8: #{tpu_custom_call.1} parent=1 // pred_region
      _
    $region9: #{tpu_custom_call.1} parent=1 // pred_fallthru
      _
    // Predicated region
    $region10: #{tpu_custom_call.1} parent=1 // pred_check
      _
    $region11: #{tpu_custom_call.1} parent=1 // pred_check_branch
      %16 = sbr.rel (0) target = $region13
    $region12: #{tpu_custom_call.1} parent=1 // pred_region
      _
    $region13: #{tpu_custom_call.1} parent=1 // pred_fallthru
      _
    // Predicated region
    $region14: #{tpu_custom_call.1} parent=1 // pred_check
      _
    $region15: #{tpu_custom_call.1} parent=1 // pred_check_branch
      %18 = sbr.rel (0) target = $region17
    $region16: #{tpu_custom_call.1} parent=1 // pred_region
      _
    $region17: #{tpu_custom_call.1} parent=1 // pred_fallthru
      _
    // Predicated region
    $region18: #{tpu_custom_call.1} parent=1 // pred_check
      _
    $region19: #{tpu_custom_call.1} parent=1 // pred_check_branch
      %20 = sbr.rel (0) target = $region21
    $region20: #{tpu_custom_call.1} parent=1 // pred_region
      _
    $region21: #{tpu_custom_call.1} parent=1 // pred_fallthru
      _
    %v22 = vld [vmem:[%s0] sm:$0xff]
    %v23 = vpack.c.bf16 %v22, %v22
    %v24 = vld [vmem:[%s1] sm:$0xf]
    %v25 = vld [vmem:[%s1 + $0x4] sm:$0xf]
    %v26 = vld [vmem:[%s1 + $0x8] sm:$0xf]
    %v27 = vld [vmem:[%s1 + $0xc] sm:$0xf]
    %v28 = vld [vmem:[%s2] sm:$0x1]
    %v30 = vlaneseq
    %v31 = vshrl.u32 %v30, 7
    %v32 = vsub.s32 0, %v31
    %v33 = vrot.slane %v28, %v32
    %v39 = vunpack.c.l.b16 %v24
    %v40 = vunpack.c.l.b16 %v25
    %v41 = vunpack.c.l.b16 %v26
    %v42 = vunpack.c.l.b16 %v27
    %v43 = vpack.c.b16 %v40, %v39
    %v44 = vpack.c.b16 %v42, %v41
    %vm47 = vcmask 261120
    %v49 = vsel %vm47, %v23, 0
    %51 = vmatprep.subr.bf16.mxu0 0
    %52 = vmatpush1.bf16.msra.mxu0 %v43
    %53 = vmatprep.subr.bf16.mxu0 0
    %54 = vmatpush1.bf16.msra.mxu0 %v44
    %55 = vmatprep.subr.bf16.mxu0 0
    %56 = vmatpush1.bf16.msra.mxu0 0
    %57 = vmatprep.subr.bf16.mxu0 0
    %58 = vmatpush1.bf16.msra.mxu0 0
    %59 = vmatprep.subr.bf16.mxu0 0
    %60 = vmatpush1.bf16.msra.mxu0 0
    %61 = vmatprep.subr.bf16.mxu0 0
    %62 = vmatpush1.bf16.msra.mxu0 0
    %63 = vmatprep.subr.bf16.mxu0 0
    %64 = vmatpush1.bf16.msra.mxu0 0
    %65 = vmatprep.subr.bf16.mxu0 0
    %66 = vmatpush1.bf16.msra.mxu0 0
    %67 = vmatprep.subr.bf16.mxu0 0
    %68 = vmatpush1.bf16.msra.mxu0 0
    %69 = vmatprep.subr.bf16.mxu0 0
    %70 = vmatpush1.bf16.msra.mxu0 0
    %71 = vmatprep.subr.bf16.mxu0 0
    %72 = vmatpush1.bf16.msra.mxu0 0
    %73 = vmatprep.subr.bf16.mxu0 0
    %74 = vmatpush1.bf16.msra.mxu0 0
    %75 = vmatprep.subr.bf16.mxu0 0
    %76 = vmatpush1.bf16.msra.mxu0 0
    %77 = vmatprep.subr.bf16.mxu0 0
    %78 = vmatpush1.bf16.msra.mxu0 0
    %79 = vmatprep.subr.bf16.mxu0 0
    %80 = vmatpush1.bf16.msra.mxu0 0
    %81 = vmatprep.subr.bf16.mxu0 0
    %82 = vmatpush1.bf16.msra.mxu0 0
    %83 = vmatprep.mubr.bf16.mxu0 0
    %84 = vmatmul.mubr.bf16.gmra.mrb[0].mxu0 %v49
    %v85 = vpop.f32.mrb[0].mxu0
    %v86 = vadd.f32 %v33, %v85
    %v87 = vpop.f32.mrb[0].mxu0
    %v88 = vpop.f32.mrb[0].mxu0
    %v89 = vpop.f32.mrb[0].mxu0
    %90 = vdwg.mxu0
    %v91 = vmax.f32 %v86, 0.0
    %v92 = vpack.c.bf16 %v91, %v91
    %v93 = vld [vmem:[%s3] sm:$0xf]
    %v94 = vld [vmem:[%s3 + $0x4] sm:$0xf]
    %v95 = vld [vmem:[%s3 + $0x8] sm:$0xf]
    %v96 = vld [vmem:[%s3 + $0xc] sm:$0xf]
    %v97 = vld [vmem:[%s3 + $0x10] sm:$0xf]
    %v98 = vld [vmem:[%s3 + $0x14] sm:$0xf]
    %v99 = vld [vmem:[%s3 + $0x18] sm:$0xf]
    %v100 = vld [vmem:[%s3 + $0x1c] sm:$0xf]
    %v101 = vld [vmem:[%s4] sm:$0x1]
    %v103 = vlaneseq
    %v104 = vshrl.u32 %v103, 7
    %v105 = vsub.s32 0, %v104
    %v106 = vrot.slane %v101, %v105
    %v116 = vunpack.c.l.b16 %v93
    %v117 = vunpack.c.l.b16 %v94
    %v118 = vunpack.c.l.b16 %v95
    %v119 = vunpack.c.l.b16 %v96
    %v120 = vunpack.c.l.b16 %v97
    %v121 = vunpack.c.l.b16 %v98
    %v122 = vunpack.c.l.b16 %v99
    %v123 = vunpack.c.l.b16 %v100
    %v124 = vpack.c.b16 %v117, %v116
    %v125 = vpack.c.b16 %v119, %v118
    %v126 = vpack.c.b16 %v121, %v120
    %v127 = vpack.c.b16 %v123, %v122
    %vm132 = vcmask 523264
    %v134 = vsel %vm132, %v92, 0
    %136 = vmatprep.subr.bf16.mxu0 0
    %137 = vmatpush1.bf16.msra.mxu0 %v124
    %138 = vmatprep.subr.bf16.mxu0 0
    %139 = vmatpush1.bf16.msra.mxu0 %v125
    %140 = vmatprep.subr.bf16.mxu0 0
    %141 = vmatpush1.bf16.msra.mxu0 %v126
    %142 = vmatprep.subr.bf16.mxu0 0
    %143 = vmatpush1.bf16.msra.mxu0 %v127
    %144 = vmatprep.subr.bf16.mxu0 0
    %145 = vmatpush1.bf16.msra.mxu0 0
    %146 = vmatprep.subr.bf16.mxu0 0
    %147 = vmatpush1.bf16.msra.mxu0 0
    %148 = vmatprep.subr.bf16.mxu0 0
    %149 = vmatpush1.bf16.msra.mxu0 0
    %150 = vmatprep.subr.bf16.mxu0 0
    %151 = vmatpush1.bf16.msra.mxu0 0
    %152 = vmatprep.subr.bf16.mxu0 0
    %153 = vmatpush1.bf16.msra.mxu0 0
    %154 = vmatprep.subr.bf16.mxu0 0
    %155 = vmatpush1.bf16.msra.mxu0 0
    %156 = vmatprep.subr.bf16.mxu0 0
    %157 = vmatpush1.bf16.msra.mxu0 0
    %158 = vmatprep.subr.bf16.mxu0 0
    %159 = vmatpush1.bf16.msra.mxu0 0
    %160 = vmatprep.subr.bf16.mxu0 0
    %161 = vmatpush1.bf16.msra.mxu0 0
    %162 = vmatprep.subr.bf16.mxu0 0
    %163 = vmatpush1.bf16.msra.mxu0 0
    %164 = vmatprep.subr.bf16.mxu0 0
    %165 = vmatpush1.bf16.msra.mxu0 0
    %166 = vmatprep.subr.bf16.mxu0 0
    %167 = vmatpush1.bf16.msra.mxu0 0
    %168 = vmatprep.mubr.bf16.mxu0 0
    %169 = vmatmul.mubr.bf16.gmra.mrb[0].mxu0 %v134
    %v170 = vpop.f32.mrb[0].mxu0
    %v171 = vadd.f32 %v106, %v170
    %v172 = vpop.f32.mrb[0].mxu0
    %v173 = vpop.f32.mrb[0].mxu0
    %v174 = vpop.f32.mrb[0].mxu0
    %175 = vdwg.mxu0
    %v176 = vxor.u32 %v171, 2147483648
    %v177 = vmul.f32 %v176, 1.442695
    %v178 = vpow.pop %v177
    %v179 = vadd.f32 %v178, 1.0
    %v180 = vrcp.pop %v179
    %v181 = vmul.f32 1.0, %v180
    %vm182 = vcmask 130048
    %183 = vst.msk [vmem:[#allocation2] sm:$0xff] %vm182, %v181
    // Predicated region
    $region22: #{tpu_custom_call.1} parent=1 // pred_check
      _
    $region23: #{tpu_custom_call.1} parent=1 // pred_check_branch
      %185 = sbr.rel (0) target = $region25
    $region24: #{tpu_custom_call.1} parent=1 // pred_region
      %s187 = ssub.s32 128, 128
      %188 = vsyncadd [#allocation3], %s187
      %s190 = sshll.u32 [#allocation2], 4
      %s191 = int_to_ptr.vmem [resolvable:$true] %s190
      %193 = dma.vmem_to_hbm [thread:$0]  %s191, 128, %s5, [#allocation3]
    $region25: #{tpu_custom_call.1} parent=1 // pred_fallthru
      _
    // Predicated region
    $region26: #{tpu_custom_call.1} parent=1 // pred_check
      _
    $region27: #{tpu_custom_call.1} parent=1 // pred_check_branch
      %195 = sbr.rel (0) target = $region29
    $region28: #{tpu_custom_call.1} parent=1 // pred_region
      %196 = dma.done [#allocation3], 128
    $region29: #{tpu_custom_call.1} parent=1 // pred_fallthru
      _
    %197 = vsyncpa [#allocation3], 1

</llo_original>
